<compile_context>
chip_gen: v7x
topology: tpu7x:2x2x1
jax: 0.10.0
libtpu: 0.0.40
codegen_flags: <defaults>
</compile_context>

<pallas_src>
import functools

import jax
import jax.numpy as jnp
from jax import lax
from jax.experimental import pallas as pl
from jax.experimental.pallas import tpu as pltpu

LANES = 128
MAX_TILE_ROWS = 2048      # (2048, 128) f32 block = 1 MiB per input per buffer
NUM_CORES = 2             # leading "parallel" axis (megacore split on v7x)


def _make_sums_kernel(n_valid, tile_rows, blocks_per_core, need_mask):
    """Build the streaming-reduction kernel with static config baked in."""

    def kernel(pred_ref, targ_ref, bce_ref, inter_ref, psum_ref, tsum_ref):
        c = pl.program_id(0)   # core-split ("parallel") axis
        i = pl.program_id(1)   # streaming reduction ("arbitrary") axis

        @pl.when(i == 0)
        def _init():
            bce_ref[...] = jnp.zeros_like(bce_ref)
            inter_ref[...] = jnp.zeros_like(inter_ref)
            psum_ref[...] = jnp.zeros_like(psum_ref)
            tsum_ref[...] = jnp.zeros_like(tsum_ref)

        x = pred_ref[...].astype(jnp.float32)
        t = targ_ref[...].astype(jnp.float32)

        if need_mask:
            # Global flat element index of each lane; masks the lane-pad tail,
            # partial last block, and duplicated (clamped) blocks.  Inputs are
            # masked BEFORE the transcendentals so garbage in the unfilled part
            # of a partial VMEM block can never produce NaN/Inf.
            base = (c * blocks_per_core + i) * (tile_rows * LANES)
            row_ids = lax.broadcasted_iota(jnp.int32, (tile_rows, LANES), 0)
            col_ids = lax.broadcasted_iota(jnp.int32, (tile_rows, LANES), 1)
            valid = (base + row_ids * LANES + col_ids) < n_valid
            x = jnp.where(valid, x, 0.0)
            t = jnp.where(valid, t, 0.0)

        # One exp per element feeds both losses.
        #   BCEWithLogits (stable): max(x,0) - x*t + log1p(exp(-|x|))
        #   sigmoid(x) = 1/(1+e) if x>=0 else e/(1+e), with e = exp(-|x|)
        e = jnp.exp(-jnp.abs(x))
        bce_elem = jnp.maximum(x, 0.0) - x * t + jnp.log1p(e)
        r = 1.0 / (1.0 + e)
        p = jnp.where(x >= 0.0, r, e * r)

        if need_mask:
            bce_elem = jnp.where(valid, bce_elem, 0.0)
            p = jnp.where(valid, p, 0.0)

        def fold(v):
            # (tile_rows, 128) -> (8, 128) partial sums: pure VPU vreg adds
            # (reshape keeps the trailing (8, 128) tile intact -> layout-free).
            return jnp.sum(v.reshape(tile_rows // 8, 8, LANES), axis=0)

        bce_ref[...] += fold(bce_elem)
        inter_ref[...] += fold(p * t)
        psum_ref[...] += fold(p)
        tsum_ref[...] += fold(t)

    return kernel


def _run_sums(pred2d, targ2d, n_valid):
    """Returns (bce_sum, intersection, pred_sum, target_sum) as f32 scalars."""
    rows = pred2d.shape[0]            # guaranteed multiple of 8 by the wrapper

    tile_rows = min(MAX_TILE_ROWS, rows)
    total_blocks = -(-rows // tile_rows)
    ncores = NUM_CORES if total_blocks >= NUM_CORES else 1
    blocks_per_core = -(-total_blocks // ncores)
    # Mask is needed whenever the (ncores x blocks_per_core) grid does not cover
    # exactly n_valid elements (lane pad, partial last block, or clamped dups).
    need_mask = (ncores * blocks_per_core * tile_rows * LANES) != n_valid

    def in_map(c, i):
        # Clamp so a ragged split never issues a DMA past the end of the array;
        # the duplicated block is fully masked out inside the kernel.
        blk = jnp.minimum(c * blocks_per_core + i, total_blocks - 1)
        return (blk, 0)

    in_spec = pl.BlockSpec((tile_rows, LANES), in_map)
    out_spec = pl.BlockSpec((8, LANES), lambda c, i: (c, 0))
    out_shape = tuple(
        jax.ShapeDtypeStruct((ncores * 8, LANES), jnp.float32) for _ in range(4)
    )

    kernel = _make_sums_kernel(n_valid, tile_rows, blocks_per_core, need_mask)

    outs = pl.pallas_call(
        kernel,
        out_shape=out_shape,
        grid_spec=pltpu.PrefetchScalarGridSpec(
            num_scalar_prefetch=0,
            grid=(ncores, blocks_per_core),
            in_specs=[in_spec, in_spec],
            out_specs=[out_spec, out_spec, out_spec, out_spec],
        ),
        compiler_params=pltpu.CompilerParams(
            dimension_semantics=("parallel", "arbitrary"),
            vmem_limit_bytes=32 * 1024 * 1024),
    )(pred2d, targ2d)

    # Tiny final cross-lane reduce (4 arrays of ncores*8*128 f32) in plain XLA.
    return tuple(jnp.sum(o) for o in outs)


@functools.partial(jax.jit, static_argnames=("bce_weight", "dice_weight",
                                             "smooth", "eps"))
def bce_dice_loss(pred, target, *, bce_weight=0.5, dice_weight=0.5,
                  smooth=1.0, eps=1e-7):
    """Combined BCEWithLogits (mean) + Dice loss on logits `pred` and `target`.

    pred, target: same shape, e.g. (B, C, H, W).  Returns a scalar f32 loss.
    Inputs are streamed in their native dtype; all math is f32 in-kernel.
    """
    pred_flat = pred.reshape(-1)
    targ_flat = target.reshape(-1)
    n = pred_flat.shape[0]

    # Pad only when needed: to a 128-lane multiple, then to 8 sublanes so the
    # 2D view is always a clean multiple of the (8, 128) vreg tile.
    padded = n
    rem = padded % LANES
    if rem:
        padded += LANES - rem
    rows = padded // LANES
    if rows % 8:
        rows += 8 - (rows % 8)
        padded = rows * LANES
    if padded != n:
        pred_flat = jnp.pad(pred_flat, (0, padded - n))
        targ_flat = jnp.pad(targ_flat, (0, padded - n))

    pred2d = pred_flat.reshape(rows, LANES)
    targ2d = targ_flat.reshape(rows, LANES)

    bce_sum, intersection, pred_sum, targ_sum = _run_sums(pred2d, targ2d, n)

    bce_mean = bce_sum / jnp.float32(n)
    union = pred_sum + targ_sum
    dice = (2.0 * intersection + smooth) / (union + smooth + eps)
    dice_loss = 1.0 - dice

    return bce_weight * bce_mean + dice_weight * dice_loss


def _reference(pred, target, bce_weight=0.5, dice_weight=0.5,
               smooth=1.0, eps=1e-7):
    x = pred.astype(jnp.float32).reshape(-1)
    t = target.astype(jnp.float32).reshape(-1)
    bce = jnp.mean(jnp.maximum(x, 0.0) - x * t + jnp.log1p(jnp.exp(-jnp.abs(x))))
    p = jax.nn.sigmoid(x)
    inter = jnp.sum(p * t)
    union = jnp.sum(p) + jnp.sum(t)
    dice = (2.0 * inter + smooth) / (union + smooth + eps)
    return bce_weight * bce + dice_weight * (1.0 - dice)


if __name__ == "__main__":
    key = jax.random.PRNGKey(0)
    k1, k2 = jax.random.split(key)
    B, C, H, W = 2, 4, 16, 16
    pred = jax.random.normal(k1, (B, C, H, W), dtype=jnp.float32)       # logits
    target = (jax.random.uniform(k2, (B, C, H, W)) > 0.5).astype(jnp.float32)

    loss = bce_dice_loss(pred, target)
    jax.block_until_ready(loss)

    ref = _reference(pred, target)
    assert jnp.allclose(loss, ref, rtol=1e-5, atol=1e-5), (loss, ref)
    print("KERNEL_OK")
</pallas_src>

<mosaic_0001>
module attributes {stable_mosaic.version = 11 : i64} {
  func.func @kernel(%arg0: i32, %arg1: i32, %arg2: memref<16x128xf32, #tpu.memory_space<vmem>>, %arg3: memref<16x128xf32, #tpu.memory_space<vmem>>, %arg4: memref<8x128xf32, #tpu.memory_space<vmem>>, %arg5: memref<8x128xf32, #tpu.memory_space<vmem>>, %arg6: memref<8x128xf32, #tpu.memory_space<vmem>>, %arg7: memref<8x128xf32, #tpu.memory_space<vmem>>) attributes {dimension_semantics = [#tpu.dimension_semantics<parallel>, #tpu.dimension_semantics<arbitrary>], iteration_bounds = array<i64: 1, 1>, scalar_prefetch = 0 : i64, scratch_operands = 0 : i64, tpu.core_type = #tpu.core_type<tc>, window_params = [{transform_indices = @transform_0, window_bounds = array<i64: 16, 128>}, {transform_indices = @transform_1, window_bounds = array<i64: 16, 128>}, {transform_indices = @transform_2, window_bounds = array<i64: 8, 128>}, {transform_indices = @transform_3, window_bounds = array<i64: 8, 128>}, {transform_indices = @transform_4, window_bounds = array<i64: 8, 128>}, {transform_indices = @transform_5, window_bounds = array<i64: 8, 128>}]} {
    %c0_i32 = arith.constant 0 : i32
    %0 = arith.cmpi eq, %arg1, %c0_i32 : i32
    %1 = arith.extui %0 : i1 to i32
    %c0_i32_0 = arith.constant 0 : i32
    %2 = arith.cmpi ne, %1, %c0_i32_0 : i32
    scf.if %2 {
      %cst_28 = arith.constant 0.000000e+00 : f32
      %44 = vector.broadcast %cst_28 : f32 to vector<8x128xf32>
      %c0_29 = arith.constant 0 : index
      %c0_30 = arith.constant 0 : index
      %45 = vector.load %arg4[%c0_29, %c0_30] : memref<8x128xf32, #tpu.memory_space<vmem>>, vector<8x128xf32>
      tpu.vector_store %arg4[%c0_29, %c0_30], %44 {strides = array<i32>} : memref<8x128xf32, #tpu.memory_space<vmem>>, vector<8x128xf32>,
      %cst_31 = arith.constant 0.000000e+00 : f32
      %46 = vector.broadcast %cst_31 : f32 to vector<8x128xf32>
      %c0_32 = arith.constant 0 : index
      %c0_33 = arith.constant 0 : index
      %47 = vector.load %arg5[%c0_32, %c0_33] : memref<8x128xf32, #tpu.memory_space<vmem>>, vector<8x128xf32>
      tpu.vector_store %arg5[%c0_32, %c0_33], %46 {strides = array<i32>} : memref<8x128xf32, #tpu.memory_space<vmem>>, vector<8x128xf32>,
      %cst_34 = arith.constant 0.000000e+00 : f32
      %48 = vector.broadcast %cst_34 : f32 to vector<8x128xf32>
      %c0_35 = arith.constant 0 : index
      %c0_36 = arith.constant 0 : index
      %49 = vector.load %arg6[%c0_35, %c0_36] : memref<8x128xf32, #tpu.memory_space<vmem>>, vector<8x128xf32>
      tpu.vector_store %arg6[%c0_35, %c0_36], %48 {strides = array<i32>} : memref<8x128xf32, #tpu.memory_space<vmem>>, vector<8x128xf32>,
      %cst_37 = arith.constant 0.000000e+00 : f32
      %50 = vector.broadcast %cst_37 : f32 to vector<8x128xf32>
      %c0_38 = arith.constant 0 : index
      %c0_39 = arith.constant 0 : index
      %51 = vector.load %arg7[%c0_38, %c0_39] : memref<8x128xf32, #tpu.memory_space<vmem>>, vector<8x128xf32>
      tpu.vector_store %arg7[%c0_38, %c0_39], %50 {strides = array<i32>} : memref<8x128xf32, #tpu.memory_space<vmem>>, vector<8x128xf32>,
    } else {
    }
    %c0 = arith.constant 0 : index
    %c0_1 = arith.constant 0 : index
    %3 = vector.load %arg2[%c0, %c0_1] : memref<16x128xf32, #tpu.memory_space<vmem>>, vector<16x128xf32>
    %c0_2 = arith.constant 0 : index
    %c0_3 = arith.constant 0 : index
    %4 = vector.load %arg3[%c0_2, %c0_3] : memref<16x128xf32, #tpu.memory_space<vmem>>, vector<16x128xf32>
    %5 = math.absf %3 : vector<16x128xf32>
    %cst = arith.constant 0.000000e+00 : f32
    %6 = vector.broadcast %cst : f32 to vector<16x128xf32>
    %7 = arith.subf %6, %5 : vector<16x128xf32>
    %8 = math.exp %7 : vector<16x128xf32>
    %cst_4 = arith.constant 0.000000e+00 : f32
    %9 = vector.broadcast %cst_4 : f32 to vector<16x128xf32>
    %10 = arith.maximumf %3, %9 : vector<16x128xf32>
    %11 = arith.mulf %3, %4 : vector<16x128xf32>
    %12 = arith.subf %10, %11 : vector<16x128xf32>
    %13 = math.log1p %8 : vector<16x128xf32>
    %14 = arith.addf %12, %13 : vector<16x128xf32>
    %cst_5 = arith.constant 1.000000e+00 : f32
    %15 = vector.broadcast %cst_5 : f32 to vector<16x128xf32>
    %16 = arith.addf %15, %8 : vector<16x128xf32>
    %cst_6 = arith.constant 1.000000e+00 : f32
    %17 = vector.broadcast %cst_6 : f32 to vector<16x128xf32>
    %18 = arith.divf %17, %16 : vector<16x128xf32>
    %cst_7 = arith.constant 0.000000e+00 : f32
    %19 = vector.broadcast %cst_7 : f32 to vector<16x128xf32>
    %20 = arith.cmpf oge, %3, %19 : vector<16x128xf32>
    %21 = arith.mulf %8, %18 : vector<16x128xf32>
    %22 = arith.select %20, %18, %21 : vector<16x128xi1>, vector<16x128xf32>
    %c0_8 = arith.constant 0 : index
    %c0_9 = arith.constant 0 : index
    %23 = vector.load %arg4[%c0_8, %c0_9] : memref<8x128xf32, #tpu.memory_space<vmem>>, vector<8x128xf32>
    %24 = vector.shape_cast %14 : vector<16x128xf32> to vector<2x8x128xf32>
    %cst_10 = arith.constant dense<0.000000e+00> : vector<8x128xf32>
    %25 = vector.multi_reduction <add>, %24, %cst_10 [0] : vector<2x8x128xf32> to vector<8x128xf32>
    %26 = arith.addf %23, %25 : vector<8x128xf32>
    %c0_11 = arith.constant 0 : index
    %c0_12 = arith.constant 0 : index
    %27 = vector.load %arg4[%c0_11, %c0_12] : memref<8x128xf32, #tpu.memory_space<vmem>>, vector<8x128xf32>
    tpu.vector_store %arg4[%c0_11, %c0_12], %26 {strides = array<i32>} : memref<8x128xf32, #tpu.memory_space<vmem>>, vector<8x128xf32>,
    %c0_13 = arith.constant 0 : index
    %c0_14 = arith.constant 0 : index
    %28 = vector.load %arg5[%c0_13, %c0_14] : memref<8x128xf32, #tpu.memory_space<vmem>>, vector<8x128xf32>
    %29 = arith.mulf %22, %4 : vector<16x128xf32>
    %30 = vector.shape_cast %29 : vector<16x128xf32> to vector<2x8x128xf32>
    %cst_15 = arith.constant dense<0.000000e+00> : vector<8x128xf32>
    %31 = vector.multi_reduction <add>, %30, %cst_15 [0] : vector<2x8x128xf32> to vector<8x128xf32>
    %32 = arith.addf %28, %31 : vector<8x128xf32>
    %c0_16 = arith.constant 0 : index
    %c0_17 = arith.constant 0 : index
    %33 = vector.load %arg5[%c0_16, %c0_17] : memref<8x128xf32, #tpu.memory_space<vmem>>, vector<8x128xf32>
    tpu.vector_store %arg5[%c0_16, %c0_17], %32 {strides = array<i32>} : memref<8x128xf32, #tpu.memory_space<vmem>>, vector<8x128xf32>,
    %c0_18 = arith.constant 0 : index
    %c0_19 = arith.constant 0 : index
    %34 = vector.load %arg6[%c0_18, %c0_19] : memref<8x128xf32, #tpu.memory_space<vmem>>, vector<8x128xf32>
    %35 = vector.shape_cast %22 : vector<16x128xf32> to vector<2x8x128xf32>
    %cst_20 = arith.constant dense<0.000000e+00> : vector<8x128xf32>
    %36 = vector.multi_reduction <add>, %35, %cst_20 [0] : vector<2x8x128xf32> to vector<8x128xf32>
    %37 = arith.addf %34, %36 : vector<8x128xf32>
    %c0_21 = arith.constant 0 : index
    %c0_22 = arith.constant 0 : index
    %38 = vector.load %arg6[%c0_21, %c0_22] : memref<8x128xf32, #tpu.memory_space<vmem>>, vector<8x128xf32>
    tpu.vector_store %arg6[%c0_21, %c0_22], %37 {strides = array<i32>} : memref<8x128xf32, #tpu.memory_space<vmem>>, vector<8x128xf32>,
    %c0_23 = arith.constant 0 : index
    %c0_24 = arith.constant 0 : index
    %39 = vector.load %arg7[%c0_23, %c0_24] : memref<8x128xf32, #tpu.memory_space<vmem>>, vector<8x128xf32>
    %40 = vector.shape_cast %4 : vector<16x128xf32> to vector<2x8x128xf32>
    %cst_25 = arith.constant dense<0.000000e+00> : vector<8x128xf32>
    %41 = vector.multi_reduction <add>, %40, %cst_25 [0] : vector<2x8x128xf32> to vector<8x128xf32>
    %42 = arith.addf %39, %41 : vector<8x128xf32>
    %c0_26 = arith.constant 0 : index
    %c0_27 = arith.constant 0 : index
    %43 = vector.load %arg7[%c0_26, %c0_27] : memref<8x128xf32, #tpu.memory_space<vmem>>, vector<8x128xf32>
    tpu.vector_store %arg7[%c0_26, %c0_27], %42 {strides = array<i32>} : memref<8x128xf32, #tpu.memory_space<vmem>>, vector<8x128xf32>,
    return
  }
  func.func @transform_0(%arg0: i32, %arg1: i32) -> (i32, i32) {
    %c1_i32 = arith.constant 1 : i32
    %0 = arith.muli %arg0, %c1_i32 : i32
    %1 = arith.addi %0, %arg1 : i32
    %c0_i32 = arith.constant 0 : i32
    %2 = arith.minsi %1, %c0_i32 : i32
    %c0_i32_0 = arith.constant 0 : i32
    %c0_i32_1 = arith.constant 0 : i32
    return %2, %c0_i32_0 : i32, i32
  }
  func.func @transform_1(%arg0: i32, %arg1: i32) -> (i32, i32) {
    %c1_i32 = arith.constant 1 : i32
    %0 = arith.muli %arg0, %c1_i32 : i32
    %1 = arith.addi %0, %arg1 : i32
    %c0_i32 = arith.constant 0 : i32
    %2 = arith.minsi %1, %c0_i32 : i32
    %c0_i32_0 = arith.constant 0 : i32
    %c0_i32_1 = arith.constant 0 : i32
    return %2, %c0_i32_0 : i32, i32
  }
  func.func @transform_2(%arg0: i32, %arg1: i32) -> (i32, i32) {
    %c0_i32 = arith.constant 0 : i32
    %c0_i32_0 = arith.constant 0 : i32
    return %arg0, %c0_i32 : i32, i32
  }
  func.func @transform_3(%arg0: i32, %arg1: i32) -> (i32, i32) {
    %c0_i32 = arith.constant 0 : i32
    %c0_i32_0 = arith.constant 0 : i32
    return %arg0, %c0_i32 : i32, i32
  }
  func.func @transform_4(%arg0: i32, %arg1: i32) -> (i32, i32) {
    %c0_i32 = arith.constant 0 : i32
    %c0_i32_0 = arith.constant 0 : i32
    return %arg0, %c0_i32 : i32, i32
  }
  func.func @transform_5(%arg0: i32, %arg1: i32) -> (i32, i32) {
    %c0_i32 = arith.constant 0 : i32
    %c0_i32_0 = arith.constant 0 : i32
    return %arg0, %c0_i32 : i32, i32
  }
}

</mosaic_0001>

<llo_original>
// kernel: bce_dice_loss.1
$region0: #{bce_dice_loss.1}
  #allocation0 [shape = 'u32[]', space=smem, size = 0x4, offset = 0x4, fixed_abs, tag = 'smem constant byte address 0x4 - core index']
  #allocation1 [shape = 'u32[144,128]{1,0:T(1,128)}', space=vmem, size = 0x12000, scoped, tag = 'internal scratch']
  %s0 = inlined_call_operand.vmem [shape: f32[16,128], index: 0, kind: input, shape index: {}]
  %s1 = inlined_call_operand.vmem [shape: f32[16,128], index: 1, kind: input, shape index: {}]
  %s2 = inlined_call_operand.vmem [shape: f32[8,128], index: 2, kind: output, shape index: {0}]
  %s3 = inlined_call_operand.vmem [shape: f32[8,128], index: 3, kind: output, shape index: {1}]
  %s4 = inlined_call_operand.vmem [shape: f32[8,128], index: 4, kind: output, shape index: {2}]
  %s5 = inlined_call_operand.vmem [shape: f32[8,128], index: 5, kind: output, shape index: {3}]
  %6 = xla_tuple %s2, %s3, %s4, %s5
  %s7 = sld [smem:[#allocation0]]
  $region46: #{bce_dice_loss.1} parent=0
    _
  %s9 = ssub.s32 1, %s7
  %s10 = scalar_select 0, %s9, %s7
  // Predicated region
  $region2: #{bce_dice_loss.1} parent=0 // pred_check
    _
  $region3: #{bce_dice_loss.1} parent=0 // pred_check_branch
    %12 = sbr.rel (0) target = $region5
  $region4: #{bce_dice_loss.1} parent=0 // pred_region
    %s13 = sadd.s32 0, 0
    %p14 = scmp.lt.s32.totalorder %s13, 0
    %s15 = scalar_select %p14, %s13, 0
    %s16 = smul.u32 2, %s15
    %p17 = scmp.lt.s32.totalorder %s16, 1
    %s18 = scalar_select %p17, %s16, 1
    %s19 = smul.addr %s18, 8
    %s20 = scalar_lea.vmem %s0, %s19
    %s21 = sadd.s32 0, 0
    %p22 = scmp.lt.s32.totalorder %s21, 0
    %s23 = scalar_select %p22, %s21, 0
    %s24 = smul.u32 2, %s23
  $region5: #{bce_dice_loss.1} parent=0 // pred_fallthru
    _
  // Predicated region
  $region6: #{bce_dice_loss.1} parent=0 // pred_check
    _
  $region7: #{bce_dice_loss.1} parent=0 // pred_check_branch
    %26 = sbr.rel (0) target = $region9
  $region8: #{bce_dice_loss.1} parent=0 // pred_region
    %s27 = sadd.s32 0, 0
    %p28 = scmp.lt.s32.totalorder %s27, 0
    %s29 = scalar_select %p28, %s27, 0
    %s30 = smul.u32 2, %s29
    %p31 = scmp.lt.s32.totalorder %s30, 1
    %s32 = scalar_select %p31, %s30, 1
    %s33 = smul.addr %s32, 8
    %s34 = scalar_lea.vmem %s1, %s33
    %s35 = sadd.s32 0, 0
    %p36 = scmp.lt.s32.totalorder %s35, 0
    %s37 = scalar_select %p36, %s35, 0
    %s38 = smul.u32 2, %s37
  $region9: #{bce_dice_loss.1} parent=0 // pred_fallthru
    _
  %s39 = sadd.s32 0, 0
  %p40 = scmp.lt.s32.totalorder %s39, 0
  %s41 = scalar_select %p40, %s39, 0
  %s42 = smul.u32 2, %s41
  %p43 = scmp.lt.s32.totalorder %s42, 1
  %s44 = scalar_select %p43, %s42, 1
  %s45 = smul.addr %s44, 8
  %s46 = scalar_lea.vmem %s0, %s45
  %s47 = sadd.s32 0, 0
  %p48 = scmp.lt.s32.totalorder %s47, 0
  %s49 = scalar_select %p48, %s47, 0
  %s50 = smul.u32 2, %s49
  %p51 = scmp.lt.s32.totalorder %s50, 1
  %s52 = scalar_select %p51, %s50, 1
  %s53 = smul.addr %s52, 8
  %s54 = scalar_lea.vmem %s1, %s53
  %s55 = sadd.s32 0, 0
  %p56 = scmp.lt.s32.totalorder %s55, 0
  %s57 = scalar_select %p56, %s55, 0
  %s58 = smul.u32 2, %s57
  %p59 = scmp.lt.s32.totalorder %s58, 1
  %s60 = scalar_select %p59, %s58, 1
  %s61 = smul.addr %s60, 8
  %s62 = scalar_lea.vmem %s0, %s61
  %s63 = sadd.s32 0, 0
  %p64 = scmp.lt.s32.totalorder %s63, 0
  %s65 = scalar_select %p64, %s63, 0
  %s66 = smul.u32 2, %s65
  %s67 = sadd.s32 0, 0
  %p68 = scmp.lt.s32.totalorder %s67, 0
  %s69 = scalar_select %p68, %s67, 0
  %s70 = smul.u32 2, %s69
  %p71 = scmp.lt.s32.totalorder %s70, 1
  %s72 = scalar_select %p71, %s70, 1
  %s73 = smul.addr %s72, 8
  %s74 = scalar_lea.vmem %s1, %s73
  %s75 = sadd.s32 0, 0
  %p76 = scmp.lt.s32.totalorder %s75, 0
  %s77 = scalar_select %p76, %s75, 0
  %s78 = smul.u32 2, %s77
  %p79 = scmp.eq.s32.totalorder 0, 0
  // Predicated region
  $region10: #{bce_dice_loss.1} parent=0 // pred_check
    %p80 = pneg %p79
  $region11: #{bce_dice_loss.1} parent=0 // pred_check_branch
    %82 = sbr.rel (%p80) target = $region13
  $region12: #{bce_dice_loss.1} parent=0 // pred_region
    %83 = vst [vmem:[%s2] sm:$0xff] 0.0
    %84 = vst [vmem:[%s3] sm:$0xff] 0.0
    %85 = vst [vmem:[%s4] sm:$0xff] 0.0
    %86 = vst [vmem:[%s5] sm:$0xff] 0.0
  $region13: #{bce_dice_loss.1} parent=0 // pred_fallthru
    _
  %v87 = vld [vmem:[%s62] sm:$0xff]
  %v88 = vld [vmem:[%s62 + $0x8] sm:$0xff]
  %v89 = vld [vmem:[%s74] sm:$0xff]
  %v90 = vld [vmem:[%s74 + $0x8] sm:$0xff]
  %v91 = vand.u32 2147483647, %v87
  %v92 = vand.u32 2147483647, %v88
  %v93 = vsub.f32 0.0, %v91
  %v94 = vsub.f32 0.0, %v92
  %v95 = vmul.f32 %v93, 1.442695
  %v96 = vpow.pop %v95
  %v97 = vmul.f32 %v94, 1.442695
  %v98 = vpow.pop %v97
  %v99 = vmax.f32 %v87, 0.0
  %v100 = vmax.f32 %v88, 0.0
  %v101 = vmul.f32 %v87, %v89
  %v102 = vmul.f32 %v88, %v90
  %v103 = vsub.f32 %v99, %v101
  %v104 = vsub.f32 %v100, %v102
  %v105 = vadd.f32 %v96, 1.0
  %v106 = vlog2.pop %v105
  %v107 = vmul.f32 %v106, 0.6931472
  %v108 = vmul.f32 -0.5, %v96
  %v109 = vadd.f32 %v108, 1.0
  %v110 = vmul.f32 %v109, %v96
  %v111 = vand.u32 2147483647, %v96
  %vm112 = vcmp.lt.f32.partialorder %v111, 0.0004427343
  %v113 = vsel %vm112, %v110, %v107
  %v114 = vadd.f32 %v98, 1.0
  %v115 = vlog2.pop %v114
  %v116 = vmul.f32 %v115, 0.6931472
  %v117 = vmul.f32 -0.5, %v98
  %v118 = vadd.f32 %v117, 1.0
  %v119 = vmul.f32 %v118, %v98
  %v120 = vand.u32 2147483647, %v98
  %vm121 = vcmp.lt.f32.partialorder %v120, 0.0004427343
  %v122 = vsel %vm121, %v119, %v116
  %v123 = vadd.f32 %v103, %v113
  %v124 = vadd.f32 %v104, %v122
  %v125 = vadd.f32 %v96, 1.0
  %v126 = vadd.f32 %v98, 1.0
  %v127 = vrcp.pop %v125
  %v128 = vmul.f32 1.0, %v127
  %v129 = vrcp.pop %v126
  %v130 = vmul.f32 1.0, %v129
  %vm131 = vcmp.ge.f32.partialorder %v87, 0.0
  %vm132 = vcmp.ge.f32.partialorder %v88, 0.0
  %v133 = vmul.f32 %v96, %v128
  %v134 = vmul.f32 %v98, %v130
  %v135 = vsel %vm131, %v128, %v133
  %v136 = vsel %vm132, %v130, %v134
  %v137 = vld [vmem:[%s2] sm:$0xff]
  %v138 = vadd.f32 %v123, %v124
  %v139 = vadd.f32 %v137, %v138
  %140 = vst [vmem:[%s2] sm:$0xff] %v139
  %v141 = vld [vmem:[%s3] sm:$0xff]
  %v142 = vmul.f32 %v135, %v89
  %v143 = vmul.f32 %v136, %v90
  %v144 = vadd.f32 %v142, %v143
  %v145 = vadd.f32 %v141, %v144
  %146 = vst [vmem:[%s3] sm:$0xff] %v145
  %v147 = vld [vmem:[%s4] sm:$0xff]
  %v148 = vadd.f32 %v135, %v136
  %v149 = vadd.f32 %v147, %v148
  %150 = vst [vmem:[%s4] sm:$0xff] %v149
  %v151 = vld [vmem:[%s5] sm:$0xff]
  %v152 = vadd.f32 %v89, %v90
  %v153 = vadd.f32 %v151, %v152
  %154 = vst [vmem:[%s5] sm:$0xff] %v153
  // Predicated region
  $region14: #{bce_dice_loss.1} parent=0 // pred_check
    _
  $region15: #{bce_dice_loss.1} parent=0 // pred_check_branch
    %156 = sbr.rel (0) target = $region17
  $region16: #{bce_dice_loss.1} parent=0 // pred_region
    _
  $region17: #{bce_dice_loss.1} parent=0 // pred_fallthru
    _
  // Predicated region
  $region18: #{bce_dice_loss.1} parent=0 // pred_check
    _
  $region19: #{bce_dice_loss.1} parent=0 // pred_check_branch
    %158 = sbr.rel (0) target = $region21
  $region20: #{bce_dice_loss.1} parent=0 // pred_region
    _
  $region21: #{bce_dice_loss.1} parent=0 // pred_fallthru
    _
  // Predicated region
  $region22: #{bce_dice_loss.1} parent=0 // pred_check
    _
  $region23: #{bce_dice_loss.1} parent=0 // pred_check_branch
    %160 = sbr.rel (0) target = $region25
  $region24: #{bce_dice_loss.1} parent=0 // pred_region
    _
  $region25: #{bce_dice_loss.1} parent=0 // pred_fallthru
    _
  // Predicated region
  $region26: #{bce_dice_loss.1} parent=0 // pred_check
    _
  $region27: #{bce_dice_loss.1} parent=0 // pred_check_branch
    %162 = sbr.rel (0) target = $region29
  $region28: #{bce_dice_loss.1} parent=0 // pred_region
    _
  $region29: #{bce_dice_loss.1} parent=0 // pred_fallthru
    _
  // Predicated region
  $region30: #{bce_dice_loss.1} parent=0 // pred_check
    _
  $region31: #{bce_dice_loss.1} parent=0 // pred_check_branch
    %164 = sbr.rel (0) target = $region33
  $region32: #{bce_dice_loss.1} parent=0 // pred_region
    _
  $region33: #{bce_dice_loss.1} parent=0 // pred_fallthru
    _
  // Predicated region
  $region34: #{bce_dice_loss.1} parent=0 // pred_check
    _
  $region35: #{bce_dice_loss.1} parent=0 // pred_check_branch
    %166 = sbr.rel (0) target = $region37
  $region36: #{bce_dice_loss.1} parent=0 // pred_region
    _
  $region37: #{bce_dice_loss.1} parent=0 // pred_fallthru
    _
  // Predicated region
  $region38: #{bce_dice_loss.1} parent=0 // pred_check
    _
  $region39: #{bce_dice_loss.1} parent=0 // pred_check_branch
    %168 = sbr.rel (0) target = $region41
  $region40: #{bce_dice_loss.1} parent=0 // pred_region
    _
  $region41: #{bce_dice_loss.1} parent=0 // pred_fallthru
    _
  // Predicated region
  $region42: #{bce_dice_loss.1} parent=0 // pred_check
    _
  $region43: #{bce_dice_loss.1} parent=0 // pred_check_branch
    %170 = sbr.rel (0) target = $region45
  $region44: #{bce_dice_loss.1} parent=0 // pred_region
    _
  $region45: #{bce_dice_loss.1} parent=0 // pred_fallthru
    _

</llo_original>
